<compile_context>
chip_gen: v6e
topology: v6e:2x2x1
jax: 0.10.0
libtpu: 0.0.40
codegen_flags: <defaults>
</compile_context>

<pallas_src>
import jax
import jax.numpy as jnp
from jax.experimental import pallas as pl
from jax.experimental.pallas import tpu as pltpu


def _round_up(x: int, m: int) -> int:
    return ((x + m - 1) // m) * m


def _cdiv(a: int, b: int) -> int:
    return -(-a // b)


def _sublane_align(dtype) -> int:
    """Native sublane packing: f32 -> 8, bf16/f16 -> 16, int8/fp8 -> 32."""
    itemsize = jnp.dtype(dtype).itemsize
    if itemsize >= 4:
        return 8
    if itemsize == 2:
        return 16
    return 32


def _balanced_tile(dim: int, max_tile: int, align: int):
    """Split `dim` into the fewest tiles <= max_tile, balanced and `align`-aligned.

    Returns (tile, padded_dim) with padded_dim = n_tiles * tile (minimal padding).
    """
    n = _cdiv(dim, max_tile)
    tile = _round_up(_cdiv(dim, n), align)
    return tile, n * tile


def _meta_linear_kernel_acc(x_ref, w_ref, b_ref, o_ref, acc_ref):
    """Narrow output dtype: accumulate in f32 VMEM scratch, bias-add + cast in epilogue."""
    # x_ref: (TM, TK), w_ref: (TN, TK), b_ref: (1, TN), o_ref: (TM, TN), acc_ref: (TM, TN) f32
    k = pl.program_id(2)

    @pl.when(k == 0)
    def _():
        acc_ref[...] = jnp.zeros_like(acc_ref)

    # F.linear: x @ W^T. Contract dim 1 of x with dim 1 of W directly on the MXU.
    acc_ref[...] += jax.lax.dot_general(
        x_ref[...],
        w_ref[...],
        dimension_numbers=(((1,), (1,)), ((), ())),
        preferred_element_type=jnp.float32,
    )

    @pl.when(k == pl.num_programs(2) - 1)
    def _():
        o_ref[...] = (acc_ref[...] + b_ref[...].astype(jnp.float32)).astype(o_ref.dtype)


def _meta_linear_kernel_f32(x_ref, w_ref, b_ref, o_ref):
    """f32 output: accumulate straight into the resident output block (no scratch)."""
    k = pl.program_id(2)

    @pl.when(k == 0)
    def _():
        # Initialize the resident output block with the broadcast bias.
        o_ref[...] = jnp.broadcast_to(b_ref[...].astype(o_ref.dtype), o_ref.shape)

    o_ref[...] += jax.lax.dot_general(
        x_ref[...],
        w_ref[...],
        dimension_numbers=(((1,), (1,)), ((), ())),
        preferred_element_type=jnp.float32,
    )


def meta_linear(x, weight, bias, *, tm=512, tn=1024, tk=1024):
    """Pallas equivalent of MetaLinear.forward(x) == F.linear(x, weight, bias).

    x: (..., In), weight: (Out, In), bias: (Out,)  ->  (..., Out)
    """
    *lead, In = x.shape
    Out, In_w = weight.shape
    assert In == In_w, "weight in_features must match x"
    assert bias.shape == (Out,)
    out_dtype = x.dtype

    x2d = x.reshape(-1, In)
    B = x2d.shape[0]

    # Balanced, minimally-padded tiling (sublane align for M is dtype-aware; lane dims 128).
    m_align = _sublane_align(x.dtype)
    TM, Mp = _balanced_tile(B, tm, m_align)
    TN, Np = _balanced_tile(Out, tn, 128)
    TK, Kp = _balanced_tile(In, tk, 128)

    # Megacore: if there is only one (i, j) tile, split N (or M) in two when it adds
    # no padding, so both TensorCores on v7x get work.
    if (Mp // TM) * (Np // TN) == 1:
        if TN % 256 == 0:
            TN //= 2
        elif TM % (2 * m_align) == 0:
            TM //= 2

    grid = (Mp // TM, Np // TN, Kp // TK)

    # Zero padding keeps the math exact (padded K columns contribute 0); with the balanced
    # tiling these pads are a no-op for most shapes and are skipped entirely.
    if (Mp, Kp) != (B, In):
        x2d = jnp.pad(x2d, ((0, Mp - B), (0, Kp - In)))
    if (Np, Kp) != (Out, In):
        weight = jnp.pad(weight, ((0, Np - Out), (0, Kp - In)))
    bias2d = (jnp.pad(bias, (0, Np - Out)) if Np != Out else bias).reshape(1, Np)

    use_acc = jnp.dtype(out_dtype) != jnp.dtype(jnp.float32)
    kernel = _meta_linear_kernel_acc if use_acc else _meta_linear_kernel_f32
    scratch = [pltpu.VMEM((TM, TN), jnp.float32)] if use_acc else []

    cost = pl.CostEstimate(
        flops=2 * B * In * Out,
        transcendentals=0,
        bytes_accessed=(B * In * jnp.dtype(x.dtype).itemsize
                        + Out * In * jnp.dtype(weight.dtype).itemsize
                        + Out * jnp.dtype(bias.dtype).itemsize
                        + B * Out * jnp.dtype(out_dtype).itemsize),
    )

    out_padded = pl.pallas_call(
        kernel,
        out_shape=jax.ShapeDtypeStruct((Mp, Np), out_dtype),
        grid_spec=pltpu.PrefetchScalarGridSpec(
            num_scalar_prefetch=0,
            grid=grid,
            in_specs=[
                pl.BlockSpec((TM, TK), lambda i, j, k: (i, k)),   # x tile
                pl.BlockSpec((TN, TK), lambda i, j, k: (j, k)),   # weight tile (streamed)
                pl.BlockSpec((1, TN), lambda i, j, k: (0, j)),    # bias tile
            ],
            out_specs=pl.BlockSpec((TM, TN), lambda i, j, k: (i, j)),
            scratch_shapes=scratch,
        ),
        compiler_params=pltpu.CompilerParams(
            dimension_semantics=("parallel", "parallel", "arbitrary"),
            vmem_limit_bytes=48 * 1024 * 1024,   # > v5e/v6e scoped defaults, < v7x 64 MiB/TC
        ),
        cost_estimate=cost,
    )(x2d, weight, bias2d)

    out = out_padded
    if (Mp, Np) != (B, Out):
        out = out[:B, :Out]
    return out.reshape(*lead, Out)


if __name__ == "__main__":
    key = jax.random.PRNGKey(0)

    def make_inputs(k, batch, in_features, out_features, dtype=jnp.float32):
        kx, kw, kb = jax.random.split(k, 3)
        bound = 1.0 / (in_features ** 0.5)
        w = jax.random.uniform(kw, (out_features, in_features),
                               minval=-bound, maxval=bound).astype(dtype)
        b = jax.random.uniform(kb, (out_features,),
                               minval=-bound, maxval=bound).astype(dtype)
        xx = jax.random.normal(kx, (batch, in_features)).astype(dtype)
        return xx, w, b

    k1, k2, k3 = jax.random.split(key, 3)

    # 1) Small shape consistent with the demo MetaLinear(in=32, out=16), batch=8.
    x, weight, bias = make_inputs(k1, batch=8, in_features=32, out_features=16)
    out = jax.block_until_ready(meta_linear(x, weight, bias))
    ref = jnp.dot(x, weight.T, precision=jax.lax.Precision.HIGHEST) + bias
    assert out.shape == (8, 16)
    assert jnp.allclose(out, ref, atol=1e-4, rtol=1e-4), "small-shape mismatch"

    # 2) Larger, non-aligned shape: balanced tiles (TM=272, TN=384x2, TK=640) -> zero padding,
    #    exercises the multi-tile parallel (i, j) grid.
    x2, w2, b2 = make_inputs(k2, batch=272, in_features=640, out_features=768)
    out2 = jax.block_until_ready(meta_linear(x2, w2, b2))
    ref2 = jnp.dot(x2, w2.T, precision=jax.lax.Precision.HIGHEST) + b2
    assert out2.shape == (272, 768)
    assert jnp.allclose(out2, ref2, atol=1e-3, rtol=1e-3), "tiled-shape mismatch"

    # 3) bf16 path: exercises the f32 accumulator scratch + dtype-aware (16-row) sublane tiling.
    x3, w3, b3 = make_inputs(k3, batch=64, in_features=256, out_features=384, dtype=jnp.bfloat16)
    out3 = jax.block_until_ready(meta_linear(x3, w3, b3))
    ref3 = (jnp.dot(x3.astype(jnp.float32), w3.astype(jnp.float32).T,
                    precision=jax.lax.Precision.HIGHEST) + b3.astype(jnp.float32))
    assert out3.shape == (64, 384) and out3.dtype == jnp.bfloat16
    assert jnp.allclose(out3.astype(jnp.float32), ref3, atol=2e-2, rtol=2e-2), "bf16 mismatch"

    print("KERNEL_OK")
</pallas_src>

<mosaic_0001>
module attributes {stable_mosaic.version = 11 : i64} {
  func.func @_meta_linear_kernel_f32(%arg0: i32, %arg1: i32, %arg2: i32, %arg3: memref<8x128xf32, #tpu.memory_space<vmem>>, %arg4: memref<128x128xf32, #tpu.memory_space<vmem>>, %arg5: memref<1x128xf32, #tpu.memory_space<vmem>>, %arg6: memref<8x128xf32, #tpu.memory_space<vmem>>) attributes {dimension_semantics = [#tpu.dimension_semantics<parallel>, #tpu.dimension_semantics<parallel>, #tpu.dimension_semantics<arbitrary>], iteration_bounds = array<i64: 1, 1, 1>, scalar_prefetch = 0 : i64, scratch_operands = 0 : i64, tpu.core_type = #tpu.core_type<tc>, window_params = [{transform_indices = @transform_0, window_bounds = array<i64: 8, 128>}, {transform_indices = @transform_1, window_bounds = array<i64: 128, 128>}, {transform_indices = @transform_2, window_bounds = array<i64: 1, 128>}, {transform_indices = @transform_3, window_bounds = array<i64: 8, 128>}]} {
    %c0_i32 = arith.constant 0 : i32
    %0 = arith.cmpi eq, %arg2, %c0_i32 : i32
    %1 = arith.extui %0 : i1 to i32
    %c0_i32_0 = arith.constant 0 : i32
    %2 = arith.cmpi ne, %1, %c0_i32_0 : i32
    scf.if %2 {
      %c0_8 = arith.constant 0 : index
      %c0_9 = arith.constant 0 : index
      %9 = vector.load %arg5[%c0_8, %c0_9] : memref<1x128xf32, #tpu.memory_space<vmem>>, vector<1x128xf32>
      %10 = vector.shape_cast %9 : vector<1x128xf32> to vector<1x128xf32>
      %11 = vector.broadcast %10 : vector<1x128xf32> to vector<8x128xf32>
      %c0_10 = arith.constant 0 : index
      %c0_11 = arith.constant 0 : index
      %12 = vector.load %arg6[%c0_10, %c0_11] : memref<8x128xf32, #tpu.memory_space<vmem>>, vector<8x128xf32>
      tpu.vector_store %arg6[%c0_10, %c0_11], %11 {strides = array<i32>} : memref<8x128xf32, #tpu.memory_space<vmem>>, vector<8x128xf32>,
    } else {
    }
    %c0 = arith.constant 0 : index
    %c0_1 = arith.constant 0 : index
    %3 = vector.load %arg6[%c0, %c0_1] : memref<8x128xf32, #tpu.memory_space<vmem>>, vector<8x128xf32>
    %c0_2 = arith.constant 0 : index
    %c0_3 = arith.constant 0 : index
    %4 = vector.load %arg3[%c0_2, %c0_3] : memref<8x128xf32, #tpu.memory_space<vmem>>, vector<8x128xf32>
    %c0_4 = arith.constant 0 : index
    %c0_5 = arith.constant 0 : index
    %5 = vector.load %arg4[%c0_4, %c0_5] : memref<128x128xf32, #tpu.memory_space<vmem>>, vector<128x128xf32>
    %cst = arith.constant dense<0.000000e+00> : vector<8x128xf32>
    %6 = tpu.matmul %4, %5, %cst {dimension_numbers = #tpu.dot_dimension_numbers<[1], [1], [0], [0], [0, 0, 1, 0], [], []>} : vector<8x128xf32>, vector<128x128xf32>, vector<8x128xf32> -> vector<8x128xf32>
    %7 = arith.addf %3, %6 : vector<8x128xf32>
    %c0_6 = arith.constant 0 : index
    %c0_7 = arith.constant 0 : index
    %8 = vector.load %arg6[%c0_6, %c0_7] : memref<8x128xf32, #tpu.memory_space<vmem>>, vector<8x128xf32>
    tpu.vector_store %arg6[%c0_6, %c0_7], %7 {strides = array<i32>} : memref<8x128xf32, #tpu.memory_space<vmem>>, vector<8x128xf32>,
    return
  }
  func.func @transform_0(%arg0: i32, %arg1: i32, %arg2: i32) -> (i32, i32) {
    %c0_i32 = arith.constant 0 : i32
    return %arg0, %arg2 : i32, i32
  }
  func.func @transform_1(%arg0: i32, %arg1: i32, %arg2: i32) -> (i32, i32) {
    %c0_i32 = arith.constant 0 : i32
    return %arg1, %arg2 : i32, i32
  }
  func.func @transform_2(%arg0: i32, %arg1: i32, %arg2: i32) -> (i32, i32) {
    %c0_i32 = arith.constant 0 : i32
    %c0_i32_0 = arith.constant 0 : i32
    return %c0_i32, %arg1 : i32, i32
  }
  func.func @transform_3(%arg0: i32, %arg1: i32, %arg2: i32) -> (i32, i32) {
    %c0_i32 = arith.constant 0 : i32
    return %arg0, %arg1 : i32, i32
  }
}

</mosaic_0001>

<llo_original>
// kernel: tpu_custom_call.1
$region0: #{tpu_custom_call.1}
  #allocation0 [shape = 'u32[]', space=smem, size = 0x4, offset = 0x4, fixed_abs, tag = 'smem constant byte address 0x4 - core index']
  #allocation1 [shape = 'u32[144,128]{1,0:T(1,128)}', space=vmem, size = 0x12000, scoped, tag = 'internal scratch']
  %s0 = inlined_call_operand.hbm [shape: f32[8,128], index: 0, kind: input, shape index: {}]
  %s1 = inlined_call_operand.hbm [shape: f32[128,128], index: 1, kind: input, shape index: {}]
  %s2 = inlined_call_operand.vmem [shape: f32[1,128], index: 2, kind: input, shape index: {}]
  %s3 = inlined_call_operand.hbm [shape: f32[8,128], index: 3, kind: output, shape index: {}]
  %s4 = sld [smem:[#allocation0]]
  $region34: #{tpu_custom_call.1} parent=0
    _
  %s6 = ssub.s32 1, %s4
  %s7 = scalar_select 0, %s6, %s4
  $region1: #{tpu_custom_call.1} parent=0
    #allocation2 [shape = 'u8[4096]{0}', space=vmem, size = 0x1000, scoped, tag = 'input window, operand 0, single buffered']
    #allocation3 [shape = 's32[1]{0}', space=sflag, size = 0x4, scoped, tag = 'scoped memory for tpu_custom_call.1']
    #allocation4 [shape = 's32[1]{0}', space=sflag, size = 0x4, scoped, tag = 'scoped memory for tpu_custom_call.1']
    #allocation5 [shape = 'u8[65536]{0}', space=vmem, size = 0x10000, scoped, tag = 'input window, operand 1, single buffered']
    #allocation6 [shape = 's32[1]{0}', space=sflag, size = 0x4, scoped, tag = 'scoped memory for tpu_custom_call.1']
    #allocation7 [shape = 'u8[4096]{0}', space=vmem, size = 0x1000, scoped, tag = 'output window, operand 0, single buffered']
    %8 = vsyncpa [#allocation3], 0
    %9 = vsyncpa [#allocation6], 0
    %10 = vsyncpa [#allocation4], 0
    // Predicated region
    $region2: #{tpu_custom_call.1} parent=1 // pred_check
      _
    $region3: #{tpu_custom_call.1} parent=1 // pred_check_branch
      %12 = sbr.rel (0) target = $region5
    $region4: #{tpu_custom_call.1} parent=1 // pred_region
      %s14 = ssub.s32 128, 128
      %15 = vsyncadd [#allocation3], %s14
      %s17 = sshll.u32 [#allocation2], 4
      %s18 = int_to_ptr.vmem [resolvable:$true] %s17
      %20 = dma.hbm_to_vmem [thread:$0]  %s0, 128, %s18, [#allocation3]
    $region5: #{tpu_custom_call.1} parent=1 // pred_fallthru
      _
    // Predicated region
    $region6: #{tpu_custom_call.1} parent=1 // pred_check
      _
    $region7: #{tpu_custom_call.1} parent=1 // pred_check_branch
      %22 = sbr.rel (0) target = $region9
    $region8: #{tpu_custom_call.1} parent=1 // pred_region
      %s24 = ssub.s32 2048, 2048
      %25 = vsyncadd [#allocation6], %s24
      %s26 = sshll.u32 [#allocation5], 4
      %s27 = int_to_ptr.vmem [resolvable:$true] %s26
      %32 = dma.hbm_to_vmem [thread:$0]  %s1, 2048, %s27, [#allocation6], 128, 128, 8
    $region9: #{tpu_custom_call.1} parent=1 // pred_fallthru
      _
    // Predicated region
    $region10: #{tpu_custom_call.1} parent=1 // pred_check
      _
    $region11: #{tpu_custom_call.1} parent=1 // pred_check_branch
      %34 = sbr.rel (0) target = $region13
    $region12: #{tpu_custom_call.1} parent=1 // pred_region
      _
    $region13: #{tpu_custom_call.1} parent=1 // pred_fallthru
      _
    // Predicated region
    $region14: #{tpu_custom_call.1} parent=1 // pred_check
      _
    $region15: #{tpu_custom_call.1} parent=1 // pred_check_branch
      %36 = sbr.rel (0) target = $region17
    $region16: #{tpu_custom_call.1} parent=1 // pred_region
      %37 = dma.done [#allocation3], 128
    $region17: #{tpu_custom_call.1} parent=1 // pred_fallthru
      _
    // Predicated region
    $region18: #{tpu_custom_call.1} parent=1 // pred_check
      _
    $region19: #{tpu_custom_call.1} parent=1 // pred_check_branch
      %39 = sbr.rel (0) target = $region21
    $region20: #{tpu_custom_call.1} parent=1 // pred_region
      %40 = dma.done [#allocation6], 2048
    $region21: #{tpu_custom_call.1} parent=1 // pred_fallthru
      _
    %p41 = scmp.eq.s32.totalorder 0, 0
    // Predicated region
    $region22: #{tpu_custom_call.1} parent=1 // pred_check
      %p42 = pneg %p41
    $region23: #{tpu_custom_call.1} parent=1 // pred_check_branch
      %44 = sbr.rel (%p42) target = $region25
    $region24: #{tpu_custom_call.1} parent=1 // pred_region
      %v45 = vld [vmem:[%s2] sm:$0x1]
      %v47 = vlaneseq
      %v48 = vshrl.u32 %v47, 7
      %v49 = vsub.s32 0, %v48
      %v50 = vrot.slane %v45, %v49
      %52 = vst [vmem:[#allocation7] sm:$0xff] %v50
    $region25: #{tpu_custom_call.1} parent=1 // pred_fallthru
      _
    %v53 = vld [vmem:[#allocation7] sm:$0xff]
    %v54 = vld [vmem:[#allocation2] sm:$0xff]
    %v55 = vld [vmem:[#allocation5] sm:$0xff]
    %v56 = vld [vmem:[#allocation5 + $0x8] sm:$0xff]
    %v57 = vld [vmem:[#allocation5 + $0x10] sm:$0xff]
    %v58 = vld [vmem:[#allocation5 + $0x18] sm:$0xff]
    %v59 = vld [vmem:[#allocation5 + $0x20] sm:$0xff]
    %v60 = vld [vmem:[#allocation5 + $0x28] sm:$0xff]
    %v61 = vld [vmem:[#allocation5 + $0x30] sm:$0xff]
    %v62 = vld [vmem:[#allocation5 + $0x38] sm:$0xff]
    %v63 = vld [vmem:[#allocation5 + $0x40] sm:$0xff]
    %v64 = vld [vmem:[#allocation5 + $0x48] sm:$0xff]
    %v65 = vld [vmem:[#allocation5 + $0x50] sm:$0xff]
    %v66 = vld [vmem:[#allocation5 + $0x58] sm:$0xff]
    %v67 = vld [vmem:[#allocation5 + $0x60] sm:$0xff]
    %v68 = vld [vmem:[#allocation5 + $0x68] sm:$0xff]
    %v69 = vld [vmem:[#allocation5 + $0x70] sm:$0xff]
    %v70 = vld [vmem:[#allocation5 + $0x78] sm:$0xff]
    %71 = vmatprep.subr.mxu0 0.0
    %72 = vmatpush1.xpose.msra.mxu0 %v70
    %73 = vmatprep.subr.mxu0 0.0
    %74 = vmatpush1.xpose.msra.mxu0 %v69
    %75 = vmatprep.subr.mxu0 0.0
    %76 = vmatpush1.xpose.msra.mxu0 %v68
    %77 = vmatprep.subr.mxu0 0.0
    %78 = vmatpush1.xpose.msra.mxu0 %v67
    %79 = vmatprep.subr.mxu0 0.0
    %80 = vmatpush1.xpose.msra.mxu0 %v66
    %81 = vmatprep.subr.mxu0 0.0
    %82 = vmatpush1.xpose.msra.mxu0 %v65
    %83 = vmatprep.subr.mxu0 0.0
    %84 = vmatpush1.xpose.msra.mxu0 %v64
    %85 = vmatprep.subr.mxu0 0.0
    %86 = vmatpush1.xpose.msra.mxu0 %v63
    %87 = vmatprep.subr.mxu0 0.0
    %88 = vmatpush1.xpose.msra.mxu0 %v62
    %89 = vmatprep.subr.mxu0 0.0
    %90 = vmatpush1.xpose.msra.mxu0 %v61
    %91 = vmatprep.subr.mxu0 0.0
    %92 = vmatpush1.xpose.msra.mxu0 %v60
    %93 = vmatprep.subr.mxu0 0.0
    %94 = vmatpush1.xpose.msra.mxu0 %v59
    %95 = vmatprep.subr.mxu0 0.0
    %96 = vmatpush1.xpose.msra.mxu0 %v58
    %97 = vmatprep.subr.mxu0 0.0
    %98 = vmatpush1.xpose.msra.mxu0 %v57
    %99 = vmatprep.subr.mxu0 0.0
    %100 = vmatpush1.xpose.msra.mxu0 %v56
    %101 = vmatprep.subr.mxu0 0.0
    %102 = vmatpush1.xpose.msra.mxu0 %v55
    %103 = vmatprep.subr.mxu0 0.0
    %104 = vmatpush2.xpose.msra.mxu0 0.0
    %105 = vmatprep.subr.mxu0 0.0
    %106 = vmatpush2.xpose.msra.mxu0 0.0
    %107 = vmatprep.subr.mxu0 0.0
    %108 = vmatpush2.xpose.msra.mxu0 0.0
    %109 = vmatprep.subr.mxu0 0.0
    %110 = vmatpush2.xpose.msra.mxu0 0.0
    %111 = vmatprep.subr.mxu0 0.0
    %112 = vmatpush2.xpose.msra.mxu0 0.0
    %113 = vmatprep.subr.mxu0 0.0
    %114 = vmatpush2.xpose.msra.mxu0 0.0
    %115 = vmatprep.subr.mxu0 0.0
    %116 = vmatpush2.xpose.msra.mxu0 0.0
    %117 = vmatprep.subr.mxu0 0.0
    %118 = vmatpush2.xpose.msra.mxu0 0.0
    %119 = vmatprep.subr.mxu0 0.0
    %120 = vmatpush2.xpose.msra.mxu0 0.0
    %121 = vmatprep.subr.mxu0 0.0
    %122 = vmatpush2.xpose.msra.mxu0 0.0
    %123 = vmatprep.subr.mxu0 0.0
    %124 = vmatpush2.xpose.msra.mxu0 0.0
    %125 = vmatprep.subr.mxu0 0.0
    %126 = vmatpush2.xpose.msra.mxu0 0.0
    %127 = vmatprep.subr.mxu0 0.0
    %128 = vmatpush2.xpose.msra.mxu0 0.0
    %129 = vmatprep.subr.mxu0 0.0
    %130 = vmatpush2.xpose.msra.mxu0 0.0
    %131 = vmatprep.subr.mxu0 0.0
    %132 = vmatpush2.xpose.msra.mxu0 0.0
    %133 = vmatprep.subr.mxu0 0.0
    %134 = vmatpush2.xpose.msra.mxu0 0.0
    %135 = vmatprep.mubr.f32.mxu0 0.0
    %136 = vmatmul.mubr.f32.gmra.mxu0 %v54
    %v137 = vpop.f32.mrf.mxu0
    %v138 = vadd.f32 0.0, %v137
    %v139 = vpop.f32.mrf.mxu0
    %140 = vdwg.mxu0
    %v141 = vadd.f32 %v53, %v138
    %142 = vst [vmem:[#allocation7] sm:$0xff] %v141
    // Predicated region
    $region26: #{tpu_custom_call.1} parent=1 // pred_check
      _
    $region27: #{tpu_custom_call.1} parent=1 // pred_check_branch
      %144 = sbr.rel (0) target = $region29
    $region28: #{tpu_custom_call.1} parent=1 // pred_region
      %s146 = ssub.s32 128, 128
      %147 = vsyncadd [#allocation4], %s146
      %s149 = sshll.u32 [#allocation7], 4
      %s150 = int_to_ptr.vmem [resolvable:$true] %s149
      %152 = dma.vmem_to_hbm [thread:$0]  %s150, 128, %s3, [#allocation4]
    $region29: #{tpu_custom_call.1} parent=1 // pred_fallthru
      _
    // Predicated region
    $region30: #{tpu_custom_call.1} parent=1 // pred_check
      _
    $region31: #{tpu_custom_call.1} parent=1 // pred_check_branch
      %154 = sbr.rel (0) target = $region33
    $region32: #{tpu_custom_call.1} parent=1 // pred_region
      %155 = dma.done [#allocation4], 128
    $region33: #{tpu_custom_call.1} parent=1 // pred_fallthru
      _
    %156 = vsyncpa [#allocation3], 1
    %157 = vsyncpa [#allocation6], 1
    %158 = vsyncpa [#allocation4], 1

</llo_original>
